<compile_context>
chip_gen: v5e
topology: v5e:2x2
jax: 0.10.0
libtpu: 0.0.40
codegen_flags: <defaults>
</compile_context>

<pallas_src>
import functools

import jax
import jax.numpy as jnp
from jax.experimental import pallas as pl
from jax.experimental.pallas import tpu as pltpu


def timesiren_kernel(x_ref, w1t_ref, w2t_ref, b2_ref, o_ref):
    # x_ref:  (TM, 1)   current row tile of the flattened input
    # w1t_ref:(1, E)    lin1 weight, transposed (VMEM resident)
    # w2t_ref:(E, E)    lin2 weight, transposed (VMEM resident)
    # b2_ref: (1, E)    lin2 bias (VMEM resident)
    # o_ref:  (TM, E)   output tile
    x = x_ref[...]
    # lin1 (K=1) as a VPU broadcast multiply, then sin on the EUP — both overlap
    # with the MXU matmul below and are effectively free filler.
    h = jnp.sin(x * w1t_ref[...])                                  # (TM, E)
    # lin2 on the MXU with f32 accumulation, plus bias.
    out = jnp.dot(h, w2t_ref[...], preferred_element_type=jnp.float32) + b2_ref[...]
    o_ref[...] = out.astype(o_ref.dtype)


def _round_up(x, m):
    return ((x + m - 1) // m) * m


def _choose_tm(n_rows, tm_max):
    """Adaptive row tile: big tiles to amortize per-step overhead, but >=2 grid
    steps once there is enough work to keep both v7x TensorCores busy."""
    n8 = _round_up(max(int(n_rows), 1), 8)
    tm_max = _round_up(max(int(tm_max), 8), 8)
    if n8 > tm_max:
        return tm_max                      # many steps anyway
    if n8 >= 512:
        return _round_up((n8 + 1) // 2, 8)  # exactly 2 steps (v7x: 1 per TC)
    return n8                              # tiny N: single step, no extra overhead


def prepare_time_siren_params(w1, w2, b2):
    """One-time parameter preprocessing (call at init, NOT per forward).

    w1: (E, 1) lin1.weight; w2: (E, E) lin2.weight; b2: (E,) lin2.bias.
    Returns (w1t, w2t, b2r) in the layout the kernel consumes.
    """
    w1t = jnp.asarray(w1, jnp.float32).T                 # (1, E)
    w2t = jnp.asarray(w2, jnp.float32).T                 # (E, E)
    b2r = jnp.asarray(b2, jnp.float32).reshape(1, -1)    # (1, E)
    return w1t, w2t, b2r


def time_siren_forward(x, w1t, w2t, b2r, *, tm_max=2048):
    """x: any shape (flattened to (-1, 1)); params from prepare_time_siren_params."""
    x2d = x.reshape(-1, 1).astype(jnp.float32)
    N = x2d.shape[0]
    E = w2t.shape[0]

    TM = _choose_tm(N, tm_max)
    Np = _round_up(N, TM)
    x_p = x2d if Np == N else jnp.pad(x2d, ((0, Np - N), (0, 0)))

    # VMEM budget: double-buffered x & out tiles + resident (default-buffered)
    # weights/bias, f32. Generous headroom, clamped to v7x physical VMEM.
    est = 4 * (2 * TM * (1 + E) + 2 * (E + E * E + E))
    vmem_limit = int(min(max(2 * est + (1 << 20), 32 << 20), 64 << 20))

    out = pl.pallas_call(
        timesiren_kernel,
        out_shape=jax.ShapeDtypeStruct((Np, E), jnp.float32),
        grid=(Np // TM,),
        in_specs=[
            pl.BlockSpec((TM, 1), lambda i: (i, 0)),   # row tile of x
            pl.BlockSpec((1, E), lambda i: (0, 0)),    # resident w1^T
            pl.BlockSpec((E, E), lambda i: (0, 0)),    # resident w2^T
            pl.BlockSpec((1, E), lambda i: (0, 0)),    # resident bias
        ],
        out_specs=pl.BlockSpec((TM, E), lambda i: (i, 0)),
        compiler_params=pltpu.CompilerParams(
            dimension_semantics=("parallel",),          # rows are independent
            vmem_limit_bytes=vmem_limit,
        ),
    )(x_p, w1t, w2t, b2r)
    return out if Np == N else out[:N]


def reference_forward(x, w1, w2, b2):
    x2d = x.reshape(-1, 1).astype(jnp.float32)
    h = jnp.sin(x2d @ w1.T)
    return h @ w2.T + b2[None, :]


if __name__ == "__main__":
    key = jax.random.PRNGKey(0)
    k_x, k_w1, k_w2, k_b2, k_x2 = jax.random.split(key, 5)

    emb_dim = 32
    batch = 8

    # PyTorch __init__ parameter shapes:
    #   lin1.weight: (emb_dim, 1)   (no bias)
    #   lin2.weight: (emb_dim, emb_dim), lin2.bias: (emb_dim,)
    w1 = jax.random.normal(k_w1, (emb_dim, 1), dtype=jnp.float32) * 0.5
    w2 = jax.random.normal(k_w2, (emb_dim, emb_dim), dtype=jnp.float32) * 0.1
    b2 = jax.random.normal(k_b2, (emb_dim,), dtype=jnp.float32) * 0.1

    # One-time parameter prep (hoisted out of the per-call hot path).
    w1t, w2t, b2r = prepare_time_siren_params(w1, w2, b2)
    fwd = jax.jit(functools.partial(time_siren_forward, tm_max=2048))

    # Example diffusion-timestep input, shape (batch,)
    x = jax.random.uniform(k_x, (batch,), dtype=jnp.float32)

    out = jax.block_until_ready(fwd(x, w1t, w2t, b2r))
    ref = reference_forward(x, w1, w2, b2)
    assert out.shape == (batch, emb_dim)
    assert jnp.allclose(out, ref, atol=1e-5, rtol=1e-5)

    # Second shape: exercises row padding, multi-step grid, and the final slice.
    x_big = jax.random.uniform(k_x2, (600,), dtype=jnp.float32)
    out_big = jax.block_until_ready(fwd(x_big, w1t, w2t, b2r))
    ref_big = reference_forward(x_big, w1, w2, b2)
    assert out_big.shape == (600, emb_dim)
    assert jnp.allclose(out_big, ref_big, atol=1e-5, rtol=1e-5)

    print("KERNEL_OK")
</pallas_src>

<mosaic_0001>
module attributes {stable_mosaic.version = 11 : i64} {
  func.func @timesiren_kernel(%arg0: i32, %arg1: memref<8x1xf32, #tpu.memory_space<vmem>>, %arg2: memref<1x32xf32, #tpu.memory_space<vmem>>, %arg3: memref<32x32xf32, #tpu.memory_space<vmem>>, %arg4: memref<1x32xf32, #tpu.memory_space<vmem>>, %arg5: memref<8x32xf32, #tpu.memory_space<vmem>>) attributes {dimension_semantics = [#tpu.dimension_semantics<parallel>], iteration_bounds = array<i64: 1>, scalar_prefetch = 0 : i64, scratch_operands = 0 : i64, tpu.core_type = #tpu.core_type<tc>, window_params = [{transform_indices = @transform_0, window_bounds = array<i64: 8, 1>}, {pipeline_mode = #tpu.pipeline_mode<synchronous>, transform_indices = @transform_1, window_bounds = array<i64: 1, 32>}, {pipeline_mode = #tpu.pipeline_mode<synchronous>, transform_indices = @transform_2, window_bounds = array<i64: 32, 32>}, {pipeline_mode = #tpu.pipeline_mode<synchronous>, transform_indices = @transform_3, window_bounds = array<i64: 1, 32>}, {transform_indices = @transform_4, window_bounds = array<i64: 8, 32>}]} {
    %c0 = arith.constant 0 : index
    %c0_0 = arith.constant 0 : index
    %0 = vector.load %arg1[%c0, %c0_0] : memref<8x1xf32, #tpu.memory_space<vmem>>, vector<8x1xf32>
    %c0_1 = arith.constant 0 : index
    %c0_2 = arith.constant 0 : index
    %1 = vector.load %arg2[%c0_1, %c0_2] : memref<1x32xf32, #tpu.memory_space<vmem>>, vector<1x32xf32>
    %2 = vector.broadcast %0 : vector<8x1xf32> to vector<8x32xf32>
    %3 = vector.broadcast %1 : vector<1x32xf32> to vector<8x32xf32>
    %4 = arith.mulf %2, %3 : vector<8x32xf32>
    %5 = math.sin %4 : vector<8x32xf32>
    %c0_3 = arith.constant 0 : index
    %c0_4 = arith.constant 0 : index
    %6 = vector.load %arg3[%c0_3, %c0_4] : memref<32x32xf32, #tpu.memory_space<vmem>>, vector<32x32xf32>
    %cst = arith.constant dense<0.000000e+00> : vector<8x32xf32>
    %7 = tpu.matmul %5, %6, %cst {dimension_numbers = #tpu.dot_dimension_numbers<[1], [0], [0], [1], [0, 0, 1, 1], [], []>} : vector<8x32xf32>, vector<32x32xf32>, vector<8x32xf32> -> vector<8x32xf32>
    %c0_5 = arith.constant 0 : index
    %c0_6 = arith.constant 0 : index
    %8 = vector.load %arg4[%c0_5, %c0_6] : memref<1x32xf32, #tpu.memory_space<vmem>>, vector<1x32xf32>
    %9 = vector.broadcast %8 : vector<1x32xf32> to vector<8x32xf32>
    %10 = arith.addf %7, %9 : vector<8x32xf32>
    %c0_7 = arith.constant 0 : index
    %c0_8 = arith.constant 0 : index
    %11 = vector.load %arg5[%c0_7, %c0_8] : memref<8x32xf32, #tpu.memory_space<vmem>>, vector<8x32xf32>
    tpu.vector_store %arg5[%c0_7, %c0_8], %10 {strides = array<i32>} : memref<8x32xf32, #tpu.memory_space<vmem>>, vector<8x32xf32>,
    return
  }
  func.func @transform_0(%arg0: i32) -> (i32, i32) {
    %c0_i32 = arith.constant 0 : i32
    %c0_i32_0 = arith.constant 0 : i32
    return %arg0, %c0_i32 : i32, i32
  }
  func.func @transform_1(%arg0: i32) -> (i32, i32) {
    %c0_i32 = arith.constant 0 : i32
    %c0_i32_0 = arith.constant 0 : i32
    %c0_i32_1 = arith.constant 0 : i32
    return %c0_i32, %c0_i32_0 : i32, i32
  }
  func.func @transform_2(%arg0: i32) -> (i32, i32) {
    %c0_i32 = arith.constant 0 : i32
    %c0_i32_0 = arith.constant 0 : i32
    %c0_i32_1 = arith.constant 0 : i32
    return %c0_i32, %c0_i32_0 : i32, i32
  }
  func.func @transform_3(%arg0: i32) -> (i32, i32) {
    %c0_i32 = arith.constant 0 : i32
    %c0_i32_0 = arith.constant 0 : i32
    %c0_i32_1 = arith.constant 0 : i32
    return %c0_i32, %c0_i32_0 : i32, i32
  }
  func.func @transform_4(%arg0: i32) -> (i32, i32) {
    %c0_i32 = arith.constant 0 : i32
    %c0_i32_0 = arith.constant 0 : i32
    return %arg0, %c0_i32 : i32, i32
  }
}

</mosaic_0001>

<llo_original>
// kernel: time_siren_forward.1
$region0: #{time_siren_forward.1}
  #allocation0 [shape = 'u32[]', space=smem, size = 0x4, offset = 0x4, fixed_abs, tag = 'smem constant byte address 0x4 - core index']
  #allocation1 [shape = 'u32[72,128]{1,0:T(1,128)}', space=vmem, size = 0x9000, scoped, tag = 'internal scratch']
  %s0 = inlined_call_operand.vmem [shape: f32[8,1], index: 0, kind: input, shape index: {}]
  %s1 = inlined_call_operand.vmem [shape: f32[1,32], index: 1, kind: input, shape index: {}]
  %s2 = inlined_call_operand.hbm [shape: f32[32,32], index: 2, kind: input, shape index: {}]
  %s3 = inlined_call_operand.vmem [shape: f32[1,32], index: 3, kind: input, shape index: {}]
  %s4 = inlined_call_operand.hbm [shape: f32[8,32], index: 4, kind: output, shape index: {}]
  %s5 = sld [smem:[#allocation0]]
  $region30: #{time_siren_forward.1} parent=0
    _
  %s7 = ssub.s32 1, %s5
  %s8 = scalar_select 0, %s7, %s5
  $region1: #{time_siren_forward.1} parent=0
    #allocation2 [shape = 'u8[16384]{0}', space=vmem, size = 0x4000, scoped, tag = 'input window, operand 2, single buffered']
    #allocation3 [shape = 's32[1]{0}', space=sflag, size = 0x4, scoped, tag = 'scoped memory for time_siren_forward.1']
    #allocation4 [shape = 's32[1]{0}', space=sflag, size = 0x4, scoped, tag = 'scoped memory for time_siren_forward.1']
    #allocation5 [shape = 'u8[4096]{0}', space=vmem, size = 0x1000, scoped, tag = 'output window, operand 0, single buffered']
    %9 = vsyncpa [#allocation3], 0
    %10 = vsyncpa [#allocation4], 0
    // Predicated region
    $region2: #{time_siren_forward.1} parent=1 // pred_check
      _
    $region3: #{time_siren_forward.1} parent=1 // pred_check_branch
      %12 = sbr.rel (0) target = $region5
    $region4: #{time_siren_forward.1} parent=1 // pred_region
      _
    $region5: #{time_siren_forward.1} parent=1 // pred_fallthru
      _
    // Predicated region
    $region6: #{time_siren_forward.1} parent=1 // pred_check
      _
    $region7: #{time_siren_forward.1} parent=1 // pred_check_branch
      %14 = sbr.rel (0) target = $region9
    $region8: #{time_siren_forward.1} parent=1 // pred_region
      _
    $region9: #{time_siren_forward.1} parent=1 // pred_fallthru
      _
    // Predicated region
    $region10: #{time_siren_forward.1} parent=1 // pred_check
      _
    $region11: #{time_siren_forward.1} parent=1 // pred_check_branch
      %16 = sbr.rel (0) target = $region13
    $region12: #{time_siren_forward.1} parent=1 // pred_region
      %18 = vsyncadd [#allocation3], 0
      %s19 = sshll.u32 %s2, 4
      %s20 = int_to_ptr.hbm [resolvable:$true] %s19
      %s21 = sshll.u32 [#allocation2], 4
      %s22 = int_to_ptr.vmem [resolvable:$true] %s21
      %27 = dma.hbm_to_vmem [thread:$0]  %s20, 512, %s22, [#allocation3], 128, 128, 8
    $region13: #{time_siren_forward.1} parent=1 // pred_fallthru
      _
    // Predicated region
    $region14: #{time_siren_forward.1} parent=1 // pred_check
      _
    $region15: #{time_siren_forward.1} parent=1 // pred_check_branch
      %29 = sbr.rel (0) target = $region17
    $region16: #{time_siren_forward.1} parent=1 // pred_region
      _
    $region17: #{time_siren_forward.1} parent=1 // pred_fallthru
      _
    // Predicated region
    $region18: #{time_siren_forward.1} parent=1 // pred_check
      _
    $region19: #{time_siren_forward.1} parent=1 // pred_check_branch
      %31 = sbr.rel (0) target = $region21
    $region20: #{time_siren_forward.1} parent=1 // pred_region
      %33 = dma.done [#allocation3], 512
    $region21: #{time_siren_forward.1} parent=1 // pred_fallthru
      _
    %v34 = vld [vmem:[%s0] sm:$0xff]
    %v35 = vld [vmem:[%s1] sm:$0x1]
    %37 = vset.pattern.permute.xlu0 0
    %38 = vperm.xlu0 %37, %v34
    %v39 = vpop.permute.xlu0 %38
    %v42 = vperm.slane %v35, 0
    %v44 = vmul.f32 %v39, %v42
    %v45 = vand.u32 2147483647, %v44
    %vm46 = vcmp.le.f32.partialorder %v45, 0.7853982
    %vm47 = vcmp.lt.s32.totalorder %v44, 0
    %v48 = vand.u32 %v44, 2139095040
    %v49 = vshrl.u32 %v48, 23
    %v50 = vsub.s32 %v49, 127
    %v51 = vand.u32 2147483647, %v44
    %v52 = vand.u32 %v51, 8388607
    %v53 = vor.u32 %v52, 8388608
    %v54 = vsub.s32 0, %v53
    %v55 = vadd.s32 %v50, 1
    %vm56 = vcmp.gt.s32.totalorder %v55, 0
    %v57 = vsel %vm56, %v55, 0
    %v58 = vshrl.u32 %v57, 5
    %v59 = vand.u32 %v57, 31
    %v60 = vsub.s32 32, %v59
    %v61 = vshrl.u32 683565275, %v60
    %v62 = vshll.u32 683565275, %v59
    %v63 = vshrl.u32 2475754826, %v60
    %v64 = vor.u32 %v62, %v63
    %v65 = vshll.u32 2475754826, %v59
    %v66 = vshrl.u32 2131351028, %v60
    %v67 = vor.u32 %v65, %v66
    %v68 = vshll.u32 2131351028, %v59
    %v69 = vshrl.u32 2102212464, %v60
    %v70 = vor.u32 %v68, %v69
    %v71 = vshll.u32 2102212464, %v59
    %v72 = vshrl.u32 920167782, %v60
    %v73 = vor.u32 %v71, %v72
    %v74 = vshll.u32 920167782, %v59
    %v75 = vshrl.u32 1326507024, %v60
    %v76 = vor.u32 %v74, %v75
    %vm77 = vcmp.lt.s32.totalorder %v58, 1
    %vm78 = vcmp.lt.s32.totalorder %v58, 2
    %vm79 = vcmp.lt.s32.totalorder %v58, 3
    %vm80 = vcmp.lt.s32.totalorder %v58, 4
    %v81 = vsel %vm77, %v61, %v64
    %v82 = vsel %vm80, %v70, 2102212464
    %v83 = vsel %vm79, %v67, %v82
    %v84 = vsel %vm78, %v81, %v83
    %v85 = vsel %vm77, %v64, %v67
    %v86 = vsel %vm80, %v73, 920167782
    %v87 = vsel %vm79, %v70, %v86
    %v88 = vsel %vm78, %v85, %v87
    %v89 = vsel %vm77, %v67, %v70
    %v90 = vsel %vm80, %v76, 1326507024
    %v91 = vsel %vm79, %v73, %v90
    %v92 = vsel %vm78, %v89, %v91
    %v93 = vshll.u32 %v53, 8
    %v94 = vand.u32 %v93, 65535
    %v95 = vshrl.u32 %v93, 16
    %v96 = vand.u32 %v92, 65535
    %v97 = vshrl.u32 %v92, 16
    %v98 = vmul.u32 %v94, %v96
    %v99 = vmul.u32 %v94, %v97
    %v100 = vmul.u32 %v95, %v96
    %v101 = vmul.u32 %v95, %v97
    %v102 = vshll.u32 %v99, 16
    %v103 = vshrl.u32 %v99, 16
    %v104 = vshll.u32 %v100, 16
    %v105 = vshrl.u32 %v100, 16
    %vm106 = vc.u32 %v98, %v102
    %v107 = vsel %vm106, 1, 0
    %v108 = vadd.s32 %v98, %v102
    %v109 = vadd.s32 %v101, %v107
    %vm110 = vc.u32 %v108, %v104
    %v111 = vsel %vm110, 1, 0
    %v112 = vadd.s32 %v108, %v104
    %v113 = vadd.s32 %v109, %v111
    %v114 = vadd.s32 %v113, %v103
    %v115 = vadd.s32 %v114, %v105
    %v116 = vand.u32 %v93, 65535
    %v117 = vshrl.u32 %v93, 16
    %v118 = vand.u32 %v88, 65535
    %v119 = vshrl.u32 %v88, 16
    %v120 = vmul.u32 %v116, %v118
    %v121 = vmul.u32 %v116, %v119
    %v122 = vmul.u32 %v117, %v118
    %v123 = vmul.u32 %v117, %v119
    %v124 = vshll.u32 %v121, 16
    %v125 = vshrl.u32 %v121, 16
    %v126 = vshll.u32 %v122, 16
    %v127 = vshrl.u32 %v122, 16
    %vm128 = vc.u32 %v120, %v124
    %v129 = vsel %vm128, 1, 0
    %v130 = vadd.s32 %v120, %v124
    %v131 = vadd.s32 %v123, %v129
    %vm132 = vc.u32 %v130, %v126
    %v133 = vsel %vm132, 1, 0
    %v134 = vadd.s32 %v130, %v126
    %v135 = vadd.s32 %v131, %v133
    %v136 = vadd.s32 %v135, %v125
    %v137 = vadd.s32 %v136, %v127
    %v138 = vmul.u32 %v93, %v84
    %v139 = vadd.s32 %v115, %v134
    %vm140 = vc.u32 %v115, %v134
    %v141 = vadd.s32 %v137, 1
    %v142 = vsel %vm140, %v141, %v137
    %v143 = vadd.s32 %v138, %v142
    %v144 = vadd.s32 %v143, 536870912
    %v145 = vshrl.u32 %v144, 30
    %v146 = vshll.u32 %v145, 30
    %v147 = vsub.s32 %v143, %v146
    %vm148 = vcmp.lt.s32.totalorder %v147, 0
    %v149 = vsub.s32 0, %v147
    %v150 = vsel %vm148, %v149, %v147
    %v151 = vclz %v150
    %v152 = vsub.s32 %v151, 2
    %vm153 = vcmp.gt.s32.totalorder 0, %v152
    %v154 = vsel %vm153, 0, %v152
    %v155 = vsub.s32 32, %v154
    %v156 = vshll.u32 %v147, %v154
    %v157 = vshrl.u32 %v139, %v155
    %v158 = vor.u32 %v156, %v157
    %v159 = vsub.s32 4294967266, %v154
    %v160 = vadd.s32 %v159, 127
    %v161 = vshll.u32 %v160, 23
    %v162 = vor.u32 4788187, %v161
    %v163 = vand.u32 2147483647, %v162
    %v165 = vcvt.s32.f32 %v158
    %v166 = vmul.f32 %v165, %v163
    %v167 = vxor.u32 %v166, 2147483648
    %v168 = vsel %vm47, %v167, %v166
    %v169 = vsub.s32 4, %v145
    %v170 = vsel %vm47, %v169, %v145
    %v171 = vsel %vm46, %v44, %v168
    %v172 = vsel %vm46, 0, %v170
    %v173 = vmul.f32 %v171, %v171
    %v174 = vmul.f32 %v173, -0.001358992
    %v175 = vadd.f32 %v174, 0.041655596
    %v176 = vmul.f32 %v173, %v175
    %v177 = vadd.f32 %v176, -0.4999988
    %v178 = vmul.f32 %v173, %v177
    %v179 = vadd.f32 1.0, %v178
    %v180 = vmul.f32 %v171, %v171
    %v181 = vmul.f32 %v180, -0.00019511016
    %v182 = vadd.f32 %v181, 0.008332121
    %v183 = vmul.f32 %v180, %v182
    %v184 = vadd.f32 %v183, -0.16666654
    %v185 = vmul.f32 %v180, %v184
    %v186 = vadd.f32 %v185, 1.0
    %v187 = vmul.f32 %v186, %v171
    %vm188 = vweird.f32 %v44
    %v189 = vadd.s32 %v172, 3
    %v190 = vand.u32 %v189, 3
    %vm191 = vcmp.lt.s32.totalorder %v190, 2
    %vm192 = vcmp.eq.s32.totalorder %v190, 0
    %v193 = vxor.u32 %v187, 2147483648
    %v194 = vsel %vm192, %v179, %v193
    %vm195 = vcmp.eq.s32.totalorder %v190, 2
    %v196 = vxor.u32 %v179, 2147483648
    %v197 = vsel %vm195, %v196, %v187
    %v198 = vsel %vm191, %v194, %v197
    %v199 = vsel %vm188, nan, %v198
    %v200 = vld [vmem:[#allocation2] sm:$0xff]
    %v201 = vld [vmem:[#allocation2 + $0x8] sm:$0xff]
    %v202 = vld [vmem:[#allocation2 + $0x10] sm:$0xff]
    %v203 = vld [vmem:[#allocation2 + $0x18] sm:$0xff]
    %v204 = vld [vmem:[%s3] sm:$0x1]
    %v206 = vperm.slane %v204, 0
    %vm208 = vcmask 261120
    %v210 = vsel %vm208, %v199, 0
    %212 = vmatpush.msra.mxu0 0.0
    %213 = vmatpush.msra.mxu0 0.0
    %214 = vmatpush.msra.mxu0 0.0
    %215 = vmatpush.msra.mxu0 0.0
    %216 = vmatpush.msra.mxu0 0.0
    %217 = vmatpush.msra.mxu0 0.0
    %218 = vmatpush.msra.mxu0 0.0
    %219 = vmatpush.msra.mxu0 0.0
    %220 = vmatpush.msra.mxu0 0.0
    %221 = vmatpush.msra.mxu0 0.0
    %222 = vmatpush.msra.mxu0 0.0
    %223 = vmatpush.msra.mxu0 0.0
    %224 = vmatpush.msra.mxu0 %v203
    %225 = vmatpush.msra.mxu0 %v202
    %226 = vmatpush.msra.mxu0 %v201
    %227 = vmatpush.msra.mxu0 %v200
    %228 = vmatmul.f32.gmra.mxu0 %v210
    %v229 = vpop.f32.mrf.mxu0
    %v230 = vadd.f32 %v206, %v229
    %231 = vdwg.mxu0
    %232 = vst.msk [vmem:[#allocation5] sm:$0xff] %vm208, %v230
    // Predicated region
    $region22: #{time_siren_forward.1} parent=1 // pred_check
      _
    $region23: #{time_siren_forward.1} parent=1 // pred_check_branch
      %234 = sbr.rel (0) target = $region25
    $region24: #{time_siren_forward.1} parent=1 // pred_region
      %236 = vsyncadd [#allocation4], 0
      %s238 = sshll.u32 [#allocation5], 4
      %s239 = int_to_ptr.vmem [resolvable:$true] %s238
      %s240 = sshll.u32 %s4, 4
      %s241 = int_to_ptr.hbm [resolvable:$true] %s240
      %243 = dma.vmem_to_hbm [thread:$0]  %s239, 128, %s241, [#allocation4]
    $region25: #{time_siren_forward.1} parent=1 // pred_fallthru
      _
    // Predicated region
    $region26: #{time_siren_forward.1} parent=1 // pred_check
      _
    $region27: #{time_siren_forward.1} parent=1 // pred_check_branch
      %245 = sbr.rel (0) target = $region29
    $region28: #{time_siren_forward.1} parent=1 // pred_region
      %247 = dma.done [#allocation4], 128
    $region29: #{time_siren_forward.1} parent=1 // pred_fallthru
      _
    %248 = vsyncpa [#allocation3], 1
    %249 = vsyncpa [#allocation4], 1

</llo_original>
